<compile_context>
chip_gen: v5e
topology: v5e:2x2
jax: 0.10.0
libtpu: 0.0.40
codegen_flags: <defaults>
</compile_context>

<pallas_src>
import jax
import jax.numpy as jnp
from jax.experimental import pallas as pl
from jax.experimental.pallas import tpu as pltpu

# ----- module hyper-parameters (globals in the original file) ---------------
TOTAL_ZONES = 4          # Z
NUM_OPTIONS = 2          # K
WEIGHT_VARIANCE = 0.1
I_DIM = 2
H_DIM = 2 * I_DIM        # hDim_1 == hDim_2 == 4
LN_EPS = 1e-5            # nn.LayerNorm default

# ----- packed-parameter row offsets (rows of the (N_ROWS, P) packed array) --
W1_OFF = 0                                 # rows [0, 8):   W1[p, i, h] -> row i*H + h
B1_OFF = W1_OFF + I_DIM * H_DIM            # rows [8, 12):  b1[p, h]
W2_OFF = B1_OFF + H_DIM                    # rows [12, 28): W2[p, g, h] -> row g*H + h
B2_OFF = W2_OFF + H_DIM * H_DIM            # rows [28, 32): b2[p, h]
WP_OFF = B2_OFF + H_DIM                    # rows [32, 40): Wpi[p, h, k] -> row h*K + k
BP_OFF = WP_OFF + H_DIM * NUM_OPTIONS      # rows [40, 42): bpi[p, k]
WB_OFF = BP_OFF + NUM_OPTIONS              # rows [42, 50): Wb[p, h, k]
BB_OFF = WB_OFF + H_DIM * NUM_OPTIONS      # rows [50, 52): bb[p, k]
N_ROWS = BB_OFF + NUM_OPTIONS              # 52


def _layernorm(h, eps=LN_EPS):
    # nn.LayerNorm with default weight=1, bias=0 and biased variance (reference).
    mu = jnp.mean(h, axis=-1, keepdims=True)
    var = jnp.mean((h - mu) ** 2, axis=-1, keepdims=True)
    return (h - mu) * jax.lax.rsqrt(var + eps)


def _pair_mlp_kernel(nt_ref, pk_ref, out_ref):
    """nt_ref: (B, Z); pk_ref: (N_ROWS, P); out_ref: (B, >=3*K*P)."""
    B, Z = nt_ref.shape
    P = pk_ref.shape[1]          # Z * Z
    H = H_DIM
    K = NUM_OPTIONS

    def row(r):
        # (1, P) parameter row; broadcasts across sublanes against (B, P).
        return pk_ref[r:r + 1, :]

    def layernorm(chans):
        # LayerNorm across the (unrolled) channel list; each entry is (B, P).
        n = len(chans)
        inv_n = 1.0 / n
        mu = chans[0]
        for c in chans[1:]:
            mu = mu + c
        mu = mu * inv_n
        cent = [c - mu for c in chans]
        var = cent[0] * cent[0]
        for c in cent[1:]:
            var = var + c * c
        var = var * inv_n
        inv = jax.lax.rsqrt(var + LN_EPS)
        return [c * inv for c in cent]

    # ----- in-kernel per-pair input gather (static lane copies) --------------
    # pair p = z * Z + zp  ->  x0[:, p] = nt[:, z],  x1[:, p] = nt[:, zp]
    nt_v = nt_ref[...]                                           # (B, Z)
    x0 = jnp.concatenate(
        [jnp.broadcast_to(nt_v[:, z:z + 1], (B, Z)) for z in range(Z)], axis=1)
    x1 = jnp.concatenate([nt_v] * Z, axis=1)                     # (B, P)

    # ----- layer 1: (B,2) @ (2,H) unrolled as VPU broadcast-MACs ------------
    h1 = []
    for h in range(H):
        pre = (x0 * row(W1_OFF + 0 * H + h)
               + x1 * row(W1_OFF + 1 * H + h)
               + row(B1_OFF + h))
        h1.append(jnp.tanh(pre))
    h1 = layernorm(h1)

    # ----- layer 2: (B,H) @ (H,H) unrolled ----------------------------------
    h2 = []
    for h in range(H):
        pre = row(B2_OFF + h)
        for g in range(H):
            pre = pre + h1[g] * row(W2_OFF + g * H + h)
        h2.append(jnp.tanh(pre))
    h2 = layernorm(h2)

    # ----- pi head: softmax + log -------------------------------------------
    logits = []
    for k in range(K):
        l = row(BP_OFF + k)
        for h in range(H):
            l = l + h2[h] * row(WP_OFF + h * K + k)
        logits.append(l)
    m = logits[0]
    for l in logits[1:]:
        m = jnp.maximum(m, l)
    shifted = [l - m for l in logits]
    exps = [jnp.exp(s) for s in shifted]
    denom = exps[0]
    for e in exps[1:]:
        denom = denom + e
    # Exact reciprocal keeps 1e-5 parity with the reference; approx=True would
    # move it fully onto the EUP at ~1e-4 relative error.
    inv_den = pl.reciprocal(denom)
    log_den = jnp.log(denom)
    pis = [e * inv_den for e in exps]
    logpis = [s - log_den for s in shifted]

    # ----- beta head: sigmoid -------------------------------------------------
    xis = []
    for k in range(K):
        l = row(BB_OFF + k)
        for h in range(H):
            l = l + h2[h] * row(WB_OFF + h * K + k)
        xis.append(jax.nn.sigmoid(l))

    # ----- single lane-dense store -------------------------------------------
    pieces = pis + logpis + xis                       # 3*K pieces of (B, P)
    pad = out_ref.shape[1] - len(pieces) * P
    if pad > 0:
        pieces.append(jnp.zeros((B, pad), jnp.float32))
    out_ref[...] = jnp.concatenate(pieces, axis=1)


def _pack_params(params, P):
    """Pack all per-pair weights/biases into one (N_ROWS, P) fp32 array."""
    w1, b1, w2, b2, wp, bp, wb, bb = params
    H, K, I = H_DIM, NUM_OPTIONS, I_DIM
    pk = jnp.concatenate([
        jnp.transpose(w1, (1, 2, 0)).reshape(I * H, P),   # row i*H + h
        jnp.transpose(b1, (1, 0)),                        # (H, P)
        jnp.transpose(w2, (1, 2, 0)).reshape(H * H, P),   # row g*H + h
        jnp.transpose(b2, (1, 0)),                        # (H, P)
        jnp.transpose(wp, (1, 2, 0)).reshape(H * K, P),   # row h*K + k
        jnp.transpose(bp, (1, 0)),                        # (K, P)
        jnp.transpose(wb, (1, 2, 0)).reshape(H * K, P),   # row h*K + k
        jnp.transpose(bb, (1, 0)),                        # (K, P)
    ], axis=0).astype(jnp.float32)
    return pk


def pairwise_option_network(nt, params, total_zones=TOTAL_ZONES,
                            num_options=NUM_OPTIONS):
    """nt: (B, Z) float array.  Returns dict with (B, Z, Z, K) arrays."""
    nt = jnp.asarray(nt, jnp.float32)
    B = nt.shape[0]
    Z = total_zones
    P = Z * Z
    K = num_options

    pk = _pack_params(params, P)                             # (N_ROWS, P)

    out_cols = 3 * K * P                                     # pi | log_pi | xi
    out_w = ((out_cols + 127) // 128) * 128                  # pad to full lanes

    out = pl.pallas_call(
        _pair_mlp_kernel,
        out_shape=jax.ShapeDtypeStruct((B, out_w), jnp.float32),
        grid=(1,),                                           # single kernel step
        in_specs=[
            pl.BlockSpec((B, Z), lambda i: (0, 0)),          # raw zone counts
            pl.BlockSpec((N_ROWS, P), lambda i: (0, 0)),     # packed params
        ],
        out_specs=pl.BlockSpec((B, out_w), lambda i: (0, 0)),
        compiler_params=pltpu.CompilerParams(
            dimension_semantics=("arbitrary",)),
    )(nt, pk)

    def head(idx):
        a = out[:, idx * K * P:(idx + 1) * K * P].reshape(B, K, Z, Z)
        return jnp.transpose(a, (0, 2, 3, 1))                # (B, Z, Z, K)

    return {"pi": head(0), "log_pi": head(1), "xi": head(2)}


def init_params(key, total_zones=TOTAL_ZONES, num_options=NUM_OPTIONS):
    """Deterministic N(0, WEIGHT_VARIANCE) init matching the module shapes
    (weights stored already transposed to (in, out) for x @ W)."""
    P = total_zones * total_zones
    H, K = H_DIM, num_options
    ks = jax.random.split(key, 8)
    std = WEIGHT_VARIANCE
    w1 = std * jax.random.normal(ks[0], (P, I_DIM, H), jnp.float32)
    b1 = std * jax.random.normal(ks[1], (P, H), jnp.float32)
    w2 = std * jax.random.normal(ks[2], (P, H, H), jnp.float32)
    b2 = std * jax.random.normal(ks[3], (P, H), jnp.float32)
    wp = std * jax.random.normal(ks[4], (P, H, K), jnp.float32)
    bp = std * jax.random.normal(ks[5], (P, K), jnp.float32)
    wb = std * jax.random.normal(ks[6], (P, H, K), jnp.float32)
    bb = std * jax.random.normal(ks[7], (P, K), jnp.float32)
    # TODO(synk): nn.LayerNorm learnable gamma/beta are at their default
    # values (1, 0) at init, so they are folded into the kernel as constants.
    return (w1, b1, w2, b2, wp, bp, wb, bb)


def _reference(nt, params, total_zones=TOTAL_ZONES, num_options=NUM_OPTIONS):
    """Pure-JAX reference mirroring the PyTorch forward (for verification)."""
    nt = jnp.asarray(nt, jnp.float32)
    B, Z, K = nt.shape[0], total_zones, num_options
    z_idx = jnp.repeat(jnp.arange(Z), Z)
    zp_idx = jnp.tile(jnp.arange(Z), Z)
    x = jnp.stack([nt[:, z_idx], nt[:, zp_idx]], axis=-1)       # (B, P, 2)
    x = jnp.transpose(x, (1, 0, 2))                             # (P, B, 2)
    w1, b1, w2, b2, wp, bp, wb, bb = params

    def one(x_p, w1p, b1p, w2p, b2p, wpp, bpp, wbp, bbp):
        h = _layernorm(jnp.tanh(x_p @ w1p + b1p))
        h = _layernorm(jnp.tanh(h @ w2p + b2p))
        logits = h @ wpp + bpp
        pi = jax.nn.softmax(logits, axis=-1)
        return pi, jnp.log(pi), jax.nn.sigmoid(h @ wbp + bbp)

    pi, log_pi, xi = jax.vmap(one)(x, w1, b1, w2, b2, wp, bp, wb, bb)
    f = lambda a: jnp.transpose(a, (1, 0, 2)).reshape(B, Z, Z, K)
    return {"pi": f(pi), "log_pi": f(log_pi), "xi": f(xi)}


if __name__ == "__main__":
    key = jax.random.PRNGKey(0)
    k_nt, k_params = jax.random.split(key)

    B = 8
    nt = jax.random.uniform(k_nt, (B, TOTAL_ZONES), jnp.float32)  # zone counts
    params = init_params(k_params)

    forward = jax.jit(pairwise_option_network)
    out = forward(nt, params)
    jax.block_until_ready(out)

    ref = _reference(nt, params)
    for name in ("pi", "log_pi", "xi"):
        assert out[name].shape == (B, TOTAL_ZONES, TOTAL_ZONES, NUM_OPTIONS), name
        assert jnp.allclose(out[name], ref[name], atol=1e-5, rtol=1e-5), name

    print("KERNEL_OK")
</pallas_src>

<mosaic_0001>
module attributes {stable_mosaic.version = 11 : i64} {
  func.func @_pair_mlp_kernel(%arg0: i32, %arg1: memref<8x4xf32, #tpu.memory_space<vmem>>, %arg2: memref<52x16xf32, #tpu.memory_space<vmem>>, %arg3: memref<8x128xf32, #tpu.memory_space<vmem>>) attributes {dimension_semantics = [#tpu.dimension_semantics<arbitrary>], iteration_bounds = array<i64: 1>, scalar_prefetch = 0 : i64, scratch_operands = 0 : i64, tpu.core_type = #tpu.core_type<tc>, window_params = [{pipeline_mode = #tpu.pipeline_mode<synchronous>, transform_indices = @transform_0, window_bounds = array<i64: 8, 4>}, {pipeline_mode = #tpu.pipeline_mode<synchronous>, transform_indices = @transform_1, window_bounds = array<i64: 52, 16>}, {pipeline_mode = #tpu.pipeline_mode<synchronous>, transform_indices = @transform_2, window_bounds = array<i64: 8, 128>}]} {
    %c0 = arith.constant 0 : index
    %c0_0 = arith.constant 0 : index
    %0 = vector.load %arg1[%c0, %c0_0] : memref<8x4xf32, #tpu.memory_space<vmem>>, vector<8x4xf32>
    %1 = vector.extract_strided_slice %0 {offsets = [0, 0], sizes = [8, 1], strides = [1, 1]} : vector<8x4xf32> to vector<8x1xf32>
    %2 = vector.shape_cast %1 : vector<8x1xf32> to vector<8x1xf32>
    %3 = vector.broadcast %2 : vector<8x1xf32> to vector<8x4xf32>
    %4 = vector.extract_strided_slice %0 {offsets = [0, 1], sizes = [8, 1], strides = [1, 1]} : vector<8x4xf32> to vector<8x1xf32>
    %5 = vector.shape_cast %4 : vector<8x1xf32> to vector<8x1xf32>
    %6 = vector.broadcast %5 : vector<8x1xf32> to vector<8x4xf32>
    %7 = vector.extract_strided_slice %0 {offsets = [0, 2], sizes = [8, 1], strides = [1, 1]} : vector<8x4xf32> to vector<8x1xf32>
    %8 = vector.shape_cast %7 : vector<8x1xf32> to vector<8x1xf32>
    %9 = vector.broadcast %8 : vector<8x1xf32> to vector<8x4xf32>
    %10 = vector.extract_strided_slice %0 {offsets = [0, 3], sizes = [8, 1], strides = [1, 1]} : vector<8x4xf32> to vector<8x1xf32>
    %11 = vector.shape_cast %10 : vector<8x1xf32> to vector<8x1xf32>
    %12 = vector.broadcast %11 : vector<8x1xf32> to vector<8x4xf32>
    %13 = tpu.concatenate %3, %6, %9, %12 in 1 : vector<8x4xf32>, vector<8x4xf32>, vector<8x4xf32>, vector<8x4xf32> -> vector<8x16xf32>
    %14 = tpu.concatenate %0, %0, %0, %0 in 1 : vector<8x4xf32>, vector<8x4xf32>, vector<8x4xf32>, vector<8x4xf32> -> vector<8x16xf32>
    %c0_1 = arith.constant 0 : index
    %c0_2 = arith.constant 0 : index
    %15 = vector.load %arg2[%c0_1, %c0_2] : memref<52x16xf32, #tpu.memory_space<vmem>>, vector<1x16xf32>
    %16 = vector.broadcast %15 : vector<1x16xf32> to vector<8x16xf32>
    %17 = arith.mulf %13, %16 : vector<8x16xf32>
    %c4 = arith.constant 4 : index
    %c0_3 = arith.constant 0 : index
    %18 = vector.load %arg2[%c4, %c0_3] : memref<52x16xf32, #tpu.memory_space<vmem>>, vector<1x16xf32>
    %19 = vector.broadcast %18 : vector<1x16xf32> to vector<8x16xf32>
    %20 = arith.mulf %14, %19 : vector<8x16xf32>
    %21 = arith.addf %17, %20 : vector<8x16xf32>
    %c8 = arith.constant 8 : index
    %c0_4 = arith.constant 0 : index
    %22 = vector.load %arg2[%c8, %c0_4] : memref<52x16xf32, #tpu.memory_space<vmem>>, vector<1x16xf32>
    %23 = vector.broadcast %22 : vector<1x16xf32> to vector<8x16xf32>
    %24 = arith.addf %21, %23 : vector<8x16xf32>
    %25 = math.tanh %24 : vector<8x16xf32>
    %c1 = arith.constant 1 : index
    %c0_5 = arith.constant 0 : index
    %26 = vector.load %arg2[%c1, %c0_5] : memref<52x16xf32, #tpu.memory_space<vmem>>, vector<1x16xf32>
    %27 = vector.broadcast %26 : vector<1x16xf32> to vector<8x16xf32>
    %28 = arith.mulf %13, %27 : vector<8x16xf32>
    %c5 = arith.constant 5 : index
    %c0_6 = arith.constant 0 : index
    %29 = vector.load %arg2[%c5, %c0_6] : memref<52x16xf32, #tpu.memory_space<vmem>>, vector<1x16xf32>
    %30 = vector.broadcast %29 : vector<1x16xf32> to vector<8x16xf32>
    %31 = arith.mulf %14, %30 : vector<8x16xf32>
    %32 = arith.addf %28, %31 : vector<8x16xf32>
    %c9 = arith.constant 9 : index
    %c0_7 = arith.constant 0 : index
    %33 = vector.load %arg2[%c9, %c0_7] : memref<52x16xf32, #tpu.memory_space<vmem>>, vector<1x16xf32>
    %34 = vector.broadcast %33 : vector<1x16xf32> to vector<8x16xf32>
    %35 = arith.addf %32, %34 : vector<8x16xf32>
    %36 = math.tanh %35 : vector<8x16xf32>
    %c2 = arith.constant 2 : index
    %c0_8 = arith.constant 0 : index
    %37 = vector.load %arg2[%c2, %c0_8] : memref<52x16xf32, #tpu.memory_space<vmem>>, vector<1x16xf32>
    %38 = vector.broadcast %37 : vector<1x16xf32> to vector<8x16xf32>
    %39 = arith.mulf %13, %38 : vector<8x16xf32>
    %c6 = arith.constant 6 : index
    %c0_9 = arith.constant 0 : index
    %40 = vector.load %arg2[%c6, %c0_9] : memref<52x16xf32, #tpu.memory_space<vmem>>, vector<1x16xf32>
    %41 = vector.broadcast %40 : vector<1x16xf32> to vector<8x16xf32>
    %42 = arith.mulf %14, %41 : vector<8x16xf32>
    %43 = arith.addf %39, %42 : vector<8x16xf32>
    %c10 = arith.constant 10 : index
    %c0_10 = arith.constant 0 : index
    %44 = vector.load %arg2[%c10, %c0_10] : memref<52x16xf32, #tpu.memory_space<vmem>>, vector<1x16xf32>
    %45 = vector.broadcast %44 : vector<1x16xf32> to vector<8x16xf32>
    %46 = arith.addf %43, %45 : vector<8x16xf32>
    %47 = math.tanh %46 : vector<8x16xf32>
    %c3 = arith.constant 3 : index
    %c0_11 = arith.constant 0 : index
    %48 = vector.load %arg2[%c3, %c0_11] : memref<52x16xf32, #tpu.memory_space<vmem>>, vector<1x16xf32>
    %49 = vector.broadcast %48 : vector<1x16xf32> to vector<8x16xf32>
    %50 = arith.mulf %13, %49 : vector<8x16xf32>
    %c7 = arith.constant 7 : index
    %c0_12 = arith.constant 0 : index
    %51 = vector.load %arg2[%c7, %c0_12] : memref<52x16xf32, #tpu.memory_space<vmem>>, vector<1x16xf32>
    %52 = vector.broadcast %51 : vector<1x16xf32> to vector<8x16xf32>
    %53 = arith.mulf %14, %52 : vector<8x16xf32>
    %54 = arith.addf %50, %53 : vector<8x16xf32>
    %c11 = arith.constant 11 : index
    %c0_13 = arith.constant 0 : index
    %55 = vector.load %arg2[%c11, %c0_13] : memref<52x16xf32, #tpu.memory_space<vmem>>, vector<1x16xf32>
    %56 = vector.broadcast %55 : vector<1x16xf32> to vector<8x16xf32>
    %57 = arith.addf %54, %56 : vector<8x16xf32>
    %58 = math.tanh %57 : vector<8x16xf32>
    %59 = arith.addf %25, %36 : vector<8x16xf32>
    %60 = arith.addf %59, %47 : vector<8x16xf32>
    %61 = arith.addf %60, %58 : vector<8x16xf32>
    %cst = arith.constant 2.500000e-01 : f32
    %62 = vector.broadcast %cst : f32 to vector<8x16xf32>
    %63 = arith.mulf %61, %62 : vector<8x16xf32>
    %64 = arith.subf %25, %63 : vector<8x16xf32>
    %65 = arith.subf %36, %63 : vector<8x16xf32>
    %66 = arith.subf %47, %63 : vector<8x16xf32>
    %67 = arith.subf %58, %63 : vector<8x16xf32>
    %68 = arith.mulf %64, %64 : vector<8x16xf32>
    %69 = arith.mulf %65, %65 : vector<8x16xf32>
    %70 = arith.addf %68, %69 : vector<8x16xf32>
    %71 = arith.mulf %66, %66 : vector<8x16xf32>
    %72 = arith.addf %70, %71 : vector<8x16xf32>
    %73 = arith.mulf %67, %67 : vector<8x16xf32>
    %74 = arith.addf %72, %73 : vector<8x16xf32>
    %cst_14 = arith.constant 2.500000e-01 : f32
    %75 = vector.broadcast %cst_14 : f32 to vector<8x16xf32>
    %76 = arith.mulf %74, %75 : vector<8x16xf32>
    %cst_15 = arith.constant 9.99999974E-6 : f32
    %77 = vector.broadcast %cst_15 : f32 to vector<8x16xf32>
    %78 = arith.addf %76, %77 : vector<8x16xf32>
    %79 = math.rsqrt %78 : vector<8x16xf32>
    %80 = arith.mulf %64, %79 : vector<8x16xf32>
    %81 = arith.mulf %65, %79 : vector<8x16xf32>
    %82 = arith.mulf %66, %79 : vector<8x16xf32>
    %83 = arith.mulf %67, %79 : vector<8x16xf32>
    %c28 = arith.constant 28 : index
    %c0_16 = arith.constant 0 : index
    %84 = vector.load %arg2[%c28, %c0_16] : memref<52x16xf32, #tpu.memory_space<vmem>>, vector<1x16xf32>
    %c12 = arith.constant 12 : index
    %c0_17 = arith.constant 0 : index
    %85 = vector.load %arg2[%c12, %c0_17] : memref<52x16xf32, #tpu.memory_space<vmem>>, vector<1x16xf32>
    %86 = vector.broadcast %85 : vector<1x16xf32> to vector<8x16xf32>
    %87 = arith.mulf %80, %86 : vector<8x16xf32>
    %88 = vector.broadcast %84 : vector<1x16xf32> to vector<8x16xf32>
    %89 = arith.addf %88, %87 : vector<8x16xf32>
    %c16 = arith.constant 16 : index
    %c0_18 = arith.constant 0 : index
    %90 = vector.load %arg2[%c16, %c0_18] : memref<52x16xf32, #tpu.memory_space<vmem>>, vector<1x16xf32>
    %91 = vector.broadcast %90 : vector<1x16xf32> to vector<8x16xf32>
    %92 = arith.mulf %81, %91 : vector<8x16xf32>
    %93 = arith.addf %89, %92 : vector<8x16xf32>
    %c20 = arith.constant 20 : index
    %c0_19 = arith.constant 0 : index
    %94 = vector.load %arg2[%c20, %c0_19] : memref<52x16xf32, #tpu.memory_space<vmem>>, vector<1x16xf32>
    %95 = vector.broadcast %94 : vector<1x16xf32> to vector<8x16xf32>
    %96 = arith.mulf %82, %95 : vector<8x16xf32>
    %97 = arith.addf %93, %96 : vector<8x16xf32>
    %c24 = arith.constant 24 : index
    %c0_20 = arith.constant 0 : index
    %98 = vector.load %arg2[%c24, %c0_20] : memref<52x16xf32, #tpu.memory_space<vmem>>, vector<1x16xf32>
    %99 = vector.broadcast %98 : vector<1x16xf32> to vector<8x16xf32>
    %100 = arith.mulf %83, %99 : vector<8x16xf32>
    %101 = arith.addf %97, %100 : vector<8x16xf32>
    %102 = math.tanh %101 : vector<8x16xf32>
    %c29 = arith.constant 29 : index
    %c0_21 = arith.constant 0 : index
    %103 = vector.load %arg2[%c29, %c0_21] : memref<52x16xf32, #tpu.memory_space<vmem>>, vector<1x16xf32>
    %c13 = arith.constant 13 : index
    %c0_22 = arith.constant 0 : index
    %104 = vector.load %arg2[%c13, %c0_22] : memref<52x16xf32, #tpu.memory_space<vmem>>, vector<1x16xf32>
    %105 = vector.broadcast %104 : vector<1x16xf32> to vector<8x16xf32>
    %106 = arith.mulf %80, %105 : vector<8x16xf32>
    %107 = vector.broadcast %103 : vector<1x16xf32> to vector<8x16xf32>
    %108 = arith.addf %107, %106 : vector<8x16xf32>
    %c17 = arith.constant 17 : index
    %c0_23 = arith.constant 0 : index
    %109 = vector.load %arg2[%c17, %c0_23] : memref<52x16xf32, #tpu.memory_space<vmem>>, vector<1x16xf32>
    %110 = vector.broadcast %109 : vector<1x16xf32> to vector<8x16xf32>
    %111 = arith.mulf %81, %110 : vector<8x16xf32>
    %112 = arith.addf %108, %111 : vector<8x16xf32>
    %c21 = arith.constant 21 : index
    %c0_24 = arith.constant 0 : index
    %113 = vector.load %arg2[%c21, %c0_24] : memref<52x16xf32, #tpu.memory_space<vmem>>, vector<1x16xf32>
    %114 = vector.broadcast %113 : vector<1x16xf32> to vector<8x16xf32>
    %115 = arith.mulf %82, %114 : vector<8x16xf32>
    %116 = arith.addf %112, %115 : vector<8x16xf32>
    %c25 = arith.constant 25 : index
    %c0_25 = arith.constant 0 : index
    %117 = vector.load %arg2[%c25, %c0_25] : memref<52x16xf32, #tpu.memory_space<vmem>>, vector<1x16xf32>
    %118 = vector.broadcast %117 : vector<1x16xf32> to vector<8x16xf32>
    %119 = arith.mulf %83, %118 : vector<8x16xf32>
    %120 = arith.addf %116, %119 : vector<8x16xf32>
    %121 = math.tanh %120 : vector<8x16xf32>
    %c30 = arith.constant 30 : index
    %c0_26 = arith.constant 0 : index
    %122 = vector.load %arg2[%c30, %c0_26] : memref<52x16xf32, #tpu.memory_space<vmem>>, vector<1x16xf32>
    %c14 = arith.constant 14 : index
    %c0_27 = arith.constant 0 : index
    %123 = vector.load %arg2[%c14, %c0_27] : memref<52x16xf32, #tpu.memory_space<vmem>>, vector<1x16xf32>
    %124 = vector.broadcast %123 : vector<1x16xf32> to vector<8x16xf32>
    %125 = arith.mulf %80, %124 : vector<8x16xf32>
    %126 = vector.broadcast %122 : vector<1x16xf32> to vector<8x16xf32>
    %127 = arith.addf %126, %125 : vector<8x16xf32>
    %c18 = arith.constant 18 : index
    %c0_28 = arith.constant 0 : index
    %128 = vector.load %arg2[%c18, %c0_28] : memref<52x16xf32, #tpu.memory_space<vmem>>, vector<1x16xf32>
    %129 = vector.broadcast %128 : vector<1x16xf32> to vector<8x16xf32>
    %130 = arith.mulf %81, %129 : vector<8x16xf32>
    %131 = arith.addf %127, %130 : vector<8x16xf32>
    %c22 = arith.constant 22 : index
    %c0_29 = arith.constant 0 : index
    %132 = vector.load %arg2[%c22, %c0_29] : memref<52x16xf32, #tpu.memory_space<vmem>>, vector<1x16xf32>
    %133 = vector.broadcast %132 : vector<1x16xf32> to vector<8x16xf32>
    %134 = arith.mulf %82, %133 : vector<8x16xf32>
    %135 = arith.addf %131, %134 : vector<8x16xf32>
    %c26 = arith.constant 26 : index
    %c0_30 = arith.constant 0 : index
    %136 = vector.load %arg2[%c26, %c0_30] : memref<52x16xf32, #tpu.memory_space<vmem>>, vector<1x16xf32>
    %137 = vector.broadcast %136 : vector<1x16xf32> to vector<8x16xf32>
    %138 = arith.mulf %83, %137 : vector<8x16xf32>
    %139 = arith.addf %135, %138 : vector<8x16xf32>
    %140 = math.tanh %139 : vector<8x16xf32>
    %c31 = arith.constant 31 : index
    %c0_31 = arith.constant 0 : index
    %141 = vector.load %arg2[%c31, %c0_31] : memref<52x16xf32, #tpu.memory_space<vmem>>, vector<1x16xf32>
    %c15 = arith.constant 15 : index
    %c0_32 = arith.constant 0 : index
    %142 = vector.load %arg2[%c15, %c0_32] : memref<52x16xf32, #tpu.memory_space<vmem>>, vector<1x16xf32>
    %143 = vector.broadcast %142 : vector<1x16xf32> to vector<8x16xf32>
    %144 = arith.mulf %80, %143 : vector<8x16xf32>
    %145 = vector.broadcast %141 : vector<1x16xf32> to vector<8x16xf32>
    %146 = arith.addf %145, %144 : vector<8x16xf32>
    %c19 = arith.constant 19 : index
    %c0_33 = arith.constant 0 : index
    %147 = vector.load %arg2[%c19, %c0_33] : memref<52x16xf32, #tpu.memory_space<vmem>>, vector<1x16xf32>
    %148 = vector.broadcast %147 : vector<1x16xf32> to vector<8x16xf32>
    %149 = arith.mulf %81, %148 : vector<8x16xf32>
    %150 = arith.addf %146, %149 : vector<8x16xf32>
    %c23 = arith.constant 23 : index
    %c0_34 = arith.constant 0 : index
    %151 = vector.load %arg2[%c23, %c0_34] : memref<52x16xf32, #tpu.memory_space<vmem>>, vector<1x16xf32>
    %152 = vector.broadcast %151 : vector<1x16xf32> to vector<8x16xf32>
    %153 = arith.mulf %82, %152 : vector<8x16xf32>
    %154 = arith.addf %150, %153 : vector<8x16xf32>
    %c27 = arith.constant 27 : index
    %c0_35 = arith.constant 0 : index
    %155 = vector.load %arg2[%c27, %c0_35] : memref<52x16xf32, #tpu.memory_space<vmem>>, vector<1x16xf32>
    %156 = vector.broadcast %155 : vector<1x16xf32> to vector<8x16xf32>
    %157 = arith.mulf %83, %156 : vector<8x16xf32>
    %158 = arith.addf %154, %157 : vector<8x16xf32>
    %159 = math.tanh %158 : vector<8x16xf32>
    %160 = arith.addf %102, %121 : vector<8x16xf32>
    %161 = arith.addf %160, %140 : vector<8x16xf32>
    %162 = arith.addf %161, %159 : vector<8x16xf32>
    %cst_36 = arith.constant 2.500000e-01 : f32
    %163 = vector.broadcast %cst_36 : f32 to vector<8x16xf32>
    %164 = arith.mulf %162, %163 : vector<8x16xf32>
    %165 = arith.subf %102, %164 : vector<8x16xf32>
    %166 = arith.subf %121, %164 : vector<8x16xf32>
    %167 = arith.subf %140, %164 : vector<8x16xf32>
    %168 = arith.subf %159, %164 : vector<8x16xf32>
    %169 = arith.mulf %165, %165 : vector<8x16xf32>
    %170 = arith.mulf %166, %166 : vector<8x16xf32>
    %171 = arith.addf %169, %170 : vector<8x16xf32>
    %172 = arith.mulf %167, %167 : vector<8x16xf32>
    %173 = arith.addf %171, %172 : vector<8x16xf32>
    %174 = arith.mulf %168, %168 : vector<8x16xf32>
    %175 = arith.addf %173, %174 : vector<8x16xf32>
    %cst_37 = arith.constant 2.500000e-01 : f32
    %176 = vector.broadcast %cst_37 : f32 to vector<8x16xf32>
    %177 = arith.mulf %175, %176 : vector<8x16xf32>
    %cst_38 = arith.constant 9.99999974E-6 : f32
    %178 = vector.broadcast %cst_38 : f32 to vector<8x16xf32>
    %179 = arith.addf %177, %178 : vector<8x16xf32>
    %180 = math.rsqrt %179 : vector<8x16xf32>
    %181 = arith.mulf %165, %180 : vector<8x16xf32>
    %182 = arith.mulf %166, %180 : vector<8x16xf32>
    %183 = arith.mulf %167, %180 : vector<8x16xf32>
    %184 = arith.mulf %168, %180 : vector<8x16xf32>
    %c40 = arith.constant 40 : index
    %c0_39 = arith.constant 0 : index
    %185 = vector.load %arg2[%c40, %c0_39] : memref<52x16xf32, #tpu.memory_space<vmem>>, vector<1x16xf32>
    %c32 = arith.constant 32 : index
    %c0_40 = arith.constant 0 : index
    %186 = vector.load %arg2[%c32, %c0_40] : memref<52x16xf32, #tpu.memory_space<vmem>>, vector<1x16xf32>
    %187 = vector.broadcast %186 : vector<1x16xf32> to vector<8x16xf32>
    %188 = arith.mulf %181, %187 : vector<8x16xf32>
    %189 = vector.broadcast %185 : vector<1x16xf32> to vector<8x16xf32>
    %190 = arith.addf %189, %188 : vector<8x16xf32>
    %c34 = arith.constant 34 : index
    %c0_41 = arith.constant 0 : index
    %191 = vector.load %arg2[%c34, %c0_41] : memref<52x16xf32, #tpu.memory_space<vmem>>, vector<1x16xf32>
    %192 = vector.broadcast %191 : vector<1x16xf32> to vector<8x16xf32>
    %193 = arith.mulf %182, %192 : vector<8x16xf32>
    %194 = arith.addf %190, %193 : vector<8x16xf32>
    %c36 = arith.constant 36 : index
    %c0_42 = arith.constant 0 : index
    %195 = vector.load %arg2[%c36, %c0_42] : memref<52x16xf32, #tpu.memory_space<vmem>>, vector<1x16xf32>
    %196 = vector.broadcast %195 : vector<1x16xf32> to vector<8x16xf32>
    %197 = arith.mulf %183, %196 : vector<8x16xf32>
    %198 = arith.addf %194, %197 : vector<8x16xf32>
    %c38 = arith.constant 38 : index
    %c0_43 = arith.constant 0 : index
    %199 = vector.load %arg2[%c38, %c0_43] : memref<52x16xf32, #tpu.memory_space<vmem>>, vector<1x16xf32>
    %200 = vector.broadcast %199 : vector<1x16xf32> to vector<8x16xf32>
    %201 = arith.mulf %184, %200 : vector<8x16xf32>
    %202 = arith.addf %198, %201 : vector<8x16xf32>
    %c41 = arith.constant 41 : index
    %c0_44 = arith.constant 0 : index
    %203 = vector.load %arg2[%c41, %c0_44] : memref<52x16xf32, #tpu.memory_space<vmem>>, vector<1x16xf32>
    %c33 = arith.constant 33 : index
    %c0_45 = arith.constant 0 : index
    %204 = vector.load %arg2[%c33, %c0_45] : memref<52x16xf32, #tpu.memory_space<vmem>>, vector<1x16xf32>
    %205 = vector.broadcast %204 : vector<1x16xf32> to vector<8x16xf32>
    %206 = arith.mulf %181, %205 : vector<8x16xf32>
    %207 = vector.broadcast %203 : vector<1x16xf32> to vector<8x16xf32>
    %208 = arith.addf %207, %206 : vector<8x16xf32>
    %c35 = arith.constant 35 : index
    %c0_46 = arith.constant 0 : index
    %209 = vector.load %arg2[%c35, %c0_46] : memref<52x16xf32, #tpu.memory_space<vmem>>, vector<1x16xf32>
    %210 = vector.broadcast %209 : vector<1x16xf32> to vector<8x16xf32>
    %211 = arith.mulf %182, %210 : vector<8x16xf32>
    %212 = arith.addf %208, %211 : vector<8x16xf32>
    %c37 = arith.constant 37 : index
    %c0_47 = arith.constant 0 : index
    %213 = vector.load %arg2[%c37, %c0_47] : memref<52x16xf32, #tpu.memory_space<vmem>>, vector<1x16xf32>
    %214 = vector.broadcast %213 : vector<1x16xf32> to vector<8x16xf32>
    %215 = arith.mulf %183, %214 : vector<8x16xf32>
    %216 = arith.addf %212, %215 : vector<8x16xf32>
    %c39 = arith.constant 39 : index
    %c0_48 = arith.constant 0 : index
    %217 = vector.load %arg2[%c39, %c0_48] : memref<52x16xf32, #tpu.memory_space<vmem>>, vector<1x16xf32>
    %218 = vector.broadcast %217 : vector<1x16xf32> to vector<8x16xf32>
    %219 = arith.mulf %184, %218 : vector<8x16xf32>
    %220 = arith.addf %216, %219 : vector<8x16xf32>
    %221 = arith.maximumf %202, %220 : vector<8x16xf32>
    %222 = arith.subf %202, %221 : vector<8x16xf32>
    %223 = arith.subf %220, %221 : vector<8x16xf32>
    %224 = math.exp %222 : vector<8x16xf32>
    %225 = math.exp %223 : vector<8x16xf32>
    %226 = arith.addf %224, %225 : vector<8x16xf32>
    %227 = tpu.reciprocal %226 : vector<8x16xf32> -> vector<8x16xf32>
    %228 = math.log %226 : vector<8x16xf32>
    %229 = arith.mulf %224, %227 : vector<8x16xf32>
    %230 = arith.mulf %225, %227 : vector<8x16xf32>
    %231 = arith.subf %222, %228 : vector<8x16xf32>
    %232 = arith.subf %223, %228 : vector<8x16xf32>
    %c50 = arith.constant 50 : index
    %c0_49 = arith.constant 0 : index
    %233 = vector.load %arg2[%c50, %c0_49] : memref<52x16xf32, #tpu.memory_space<vmem>>, vector<1x16xf32>
    %c42 = arith.constant 42 : index
    %c0_50 = arith.constant 0 : index
    %234 = vector.load %arg2[%c42, %c0_50] : memref<52x16xf32, #tpu.memory_space<vmem>>, vector<1x16xf32>
    %235 = vector.broadcast %234 : vector<1x16xf32> to vector<8x16xf32>
    %236 = arith.mulf %181, %235 : vector<8x16xf32>
    %237 = vector.broadcast %233 : vector<1x16xf32> to vector<8x16xf32>
    %238 = arith.addf %237, %236 : vector<8x16xf32>
    %c44 = arith.constant 44 : index
    %c0_51 = arith.constant 0 : index
    %239 = vector.load %arg2[%c44, %c0_51] : memref<52x16xf32, #tpu.memory_space<vmem>>, vector<1x16xf32>
    %240 = vector.broadcast %239 : vector<1x16xf32> to vector<8x16xf32>
    %241 = arith.mulf %182, %240 : vector<8x16xf32>
    %242 = arith.addf %238, %241 : vector<8x16xf32>
    %c46 = arith.constant 46 : index
    %c0_52 = arith.constant 0 : index
    %243 = vector.load %arg2[%c46, %c0_52] : memref<52x16xf32, #tpu.memory_space<vmem>>, vector<1x16xf32>
    %244 = vector.broadcast %243 : vector<1x16xf32> to vector<8x16xf32>
    %245 = arith.mulf %183, %244 : vector<8x16xf32>
    %246 = arith.addf %242, %245 : vector<8x16xf32>
    %c48 = arith.constant 48 : index
    %c0_53 = arith.constant 0 : index
    %247 = vector.load %arg2[%c48, %c0_53] : memref<52x16xf32, #tpu.memory_space<vmem>>, vector<1x16xf32>
    %248 = vector.broadcast %247 : vector<1x16xf32> to vector<8x16xf32>
    %249 = arith.mulf %184, %248 : vector<8x16xf32>
    %250 = arith.addf %246, %249 : vector<8x16xf32>
    %251 = arith.negf %250 : vector<8x16xf32>
    %252 = math.exp %251 : vector<8x16xf32>
    %cst_54 = arith.constant 1.000000e+00 : f32
    %253 = vector.broadcast %cst_54 : f32 to vector<8x16xf32>
    %254 = arith.addf %253, %252 : vector<8x16xf32>
    %255 = arith.divf %253, %254 : vector<8x16xf32>
    %c51 = arith.constant 51 : index
    %c0_55 = arith.constant 0 : index
    %256 = vector.load %arg2[%c51, %c0_55] : memref<52x16xf32, #tpu.memory_space<vmem>>, vector<1x16xf32>
    %c43 = arith.constant 43 : index
    %c0_56 = arith.constant 0 : index
    %257 = vector.load %arg2[%c43, %c0_56] : memref<52x16xf32, #tpu.memory_space<vmem>>, vector<1x16xf32>
    %258 = vector.broadcast %257 : vector<1x16xf32> to vector<8x16xf32>
    %259 = arith.mulf %181, %258 : vector<8x16xf32>
    %260 = vector.broadcast %256 : vector<1x16xf32> to vector<8x16xf32>
    %261 = arith.addf %260, %259 : vector<8x16xf32>
    %c45 = arith.constant 45 : index
    %c0_57 = arith.constant 0 : index
    %262 = vector.load %arg2[%c45, %c0_57] : memref<52x16xf32, #tpu.memory_space<vmem>>, vector<1x16xf32>
    %263 = vector.broadcast %262 : vector<1x16xf32> to vector<8x16xf32>
    %264 = arith.mulf %182, %263 : vector<8x16xf32>
    %265 = arith.addf %261, %264 : vector<8x16xf32>
    %c47 = arith.constant 47 : index
    %c0_58 = arith.constant 0 : index
    %266 = vector.load %arg2[%c47, %c0_58] : memref<52x16xf32, #tpu.memory_space<vmem>>, vector<1x16xf32>
    %267 = vector.broadcast %266 : vector<1x16xf32> to vector<8x16xf32>
    %268 = arith.mulf %183, %267 : vector<8x16xf32>
    %269 = arith.addf %265, %268 : vector<8x16xf32>
    %c49 = arith.constant 49 : index
    %c0_59 = arith.constant 0 : index
    %270 = vector.load %arg2[%c49, %c0_59] : memref<52x16xf32, #tpu.memory_space<vmem>>, vector<1x16xf32>
    %271 = vector.broadcast %270 : vector<1x16xf32> to vector<8x16xf32>
    %272 = arith.mulf %184, %271 : vector<8x16xf32>
    %273 = arith.addf %269, %272 : vector<8x16xf32>
    %274 = arith.negf %273 : vector<8x16xf32>
    %275 = math.exp %274 : vector<8x16xf32>
    %cst_60 = arith.constant 1.000000e+00 : f32
    %276 = vector.broadcast %cst_60 : f32 to vector<8x16xf32>
    %277 = arith.addf %276, %275 : vector<8x16xf32>
    %278 = arith.divf %276, %277 : vector<8x16xf32>
    %cst_61 = arith.constant 0.000000e+00 : f32
    %279 = vector.broadcast %cst_61 : f32 to vector<8x32xf32>
    %280 = tpu.concatenate %229, %230, %231, %232, %255, %278, %279 in 1 : vector<8x16xf32>, vector<8x16xf32>, vector<8x16xf32>, vector<8x16xf32>, vector<8x16xf32>, vector<8x16xf32>, vector<8x32xf32> -> vector<8x128xf32>
    %c0_62 = arith.constant 0 : index
    %c0_63 = arith.constant 0 : index
    %281 = vector.load %arg3[%c0_62, %c0_63] : memref<8x128xf32, #tpu.memory_space<vmem>>, vector<8x128xf32>
    tpu.vector_store %arg3[%c0_62, %c0_63], %280 {strides = array<i32>} : memref<8x128xf32, #tpu.memory_space<vmem>>, vector<8x128xf32>,
    return
  }
  func.func @transform_0(%arg0: i32) -> (i32, i32) {
    %c0_i32 = arith.constant 0 : i32
    %c0_i32_0 = arith.constant 0 : i32
    %c0_i32_1 = arith.constant 0 : i32
    return %c0_i32, %c0_i32_0 : i32, i32
  }
  func.func @transform_1(%arg0: i32) -> (i32, i32) {
    %c0_i32 = arith.constant 0 : i32
    %c0_i32_0 = arith.constant 0 : i32
    %c0_i32_1 = arith.constant 0 : i32
    return %c0_i32, %c0_i32_0 : i32, i32
  }
  func.func @transform_2(%arg0: i32) -> (i32, i32) {
    %c0_i32 = arith.constant 0 : i32
    %c0_i32_0 = arith.constant 0 : i32
    %c0_i32_1 = arith.constant 0 : i32
    return %c0_i32, %c0_i32_0 : i32, i32
  }
}

</mosaic_0001>

<llo_original>
// kernel: pairwise_option_network.1
$region0: #{pairwise_option_network.1}
  #allocation0 [shape = 'u32[]', space=smem, size = 0x4, offset = 0x4, fixed_abs, tag = 'smem constant byte address 0x4 - core index']
  #allocation1 [shape = 'u32[72,128]{1,0:T(1,128)}', space=vmem, size = 0x9000, scoped, tag = 'internal scratch']
  %s0 = inlined_call_operand.vmem [shape: f32[8,4], index: 0, kind: input, shape index: {}]
  %s1 = inlined_call_operand.vmem [shape: f32[52,16], index: 1, kind: input, shape index: {}]
  %s2 = inlined_call_operand.vmem [shape: f32[8,128], index: 2, kind: output, shape index: {}]
  %s3 = sld [smem:[#allocation0]]
  $region18: #{pairwise_option_network.1} parent=0
    _
  %s5 = ssub.s32 1, %s3
  %s6 = scalar_select 0, %s5, %s3
  // Predicated region
  $region2: #{pairwise_option_network.1} parent=0 // pred_check
    _
  $region3: #{pairwise_option_network.1} parent=0 // pred_check_branch
    %8 = sbr.rel (0) target = $region5
  $region4: #{pairwise_option_network.1} parent=0 // pred_region
    _
  $region5: #{pairwise_option_network.1} parent=0 // pred_fallthru
    _
  // Predicated region
  $region6: #{pairwise_option_network.1} parent=0 // pred_check
    _
  $region7: #{pairwise_option_network.1} parent=0 // pred_check_branch
    %10 = sbr.rel (0) target = $region9
  $region8: #{pairwise_option_network.1} parent=0 // pred_region
    _
  $region9: #{pairwise_option_network.1} parent=0 // pred_fallthru
    _
  %v11 = vld [vmem:[%s0] sm:$0xff]
  %13 = vset.pattern.permute.xlu0 0
  %14 = vperm.xlu0 %13, %v11
  %v15 = vpop.permute.xlu0 %14
  %17 = vset.pattern.permute.xlu0 1
  %18 = vperm.xlu0 %17, %v11
  %v19 = vpop.permute.xlu0 %18
  %21 = vset.pattern.permute.xlu0 2
  %22 = vperm.xlu0 %21, %v11
  %v23 = vpop.permute.xlu0 %22
  %25 = vset.pattern.permute.xlu0 3
  %26 = vperm.xlu0 %25, %v11
  %v27 = vpop.permute.xlu0 %26
  %vm29 = vcmask 31744
  %v30 = vsel %vm29, %v15, %v19
  %vm31 = vcmask 64512
  %v32 = vsel %vm31, %v30, %v23
  %vm33 = vcmask 97280
  %v34 = vsel %vm33, %v32, %v27
  %35 = vrot.lane.b32.xlu0 %v11, 4
  %v36 = vpop.permute.xlu0 %35
  %38 = vrot.lane.b32.xlu0 %v11, 8
  %v39 = vpop.permute.xlu0 %38
  %41 = vrot.lane.b32.xlu0 %v11, 12
  %v42 = vpop.permute.xlu0 %41
  %v44 = vsel %vm29, %v11, %v36
  %v45 = vsel %vm31, %v44, %v39
  %v46 = vsel %vm33, %v45, %v42
  %v47 = vld [vmem:[%s1] sm:$0x1]
  %v48 = vperm.slane %v47, 0
  %v49 = vmul.f32 %v34, %v48
  %v50 = vld [vmem:[%s1 + $0x4] sm:$0x1]
  %v51 = vperm.slane %v50, 0
  %v52 = vmul.f32 %v46, %v51
  %v53 = vadd.f32 %v49, %v52
  %v54 = vld [vmem:[%s1 + $0x8] sm:$0x1]
  %v55 = vperm.slane %v54, 0
  %v56 = vadd.f32 %v53, %v55
  %v57 = vtanh.pop %v56
  %v58 = vld [vmem:[%s1 + $0x1] sm:$0x1]
  %v59 = vperm.slane %v58, 0
  %v60 = vmul.f32 %v34, %v59
  %v61 = vld [vmem:[%s1 + $0x5] sm:$0x1]
  %v62 = vperm.slane %v61, 0
  %v63 = vmul.f32 %v46, %v62
  %v64 = vadd.f32 %v60, %v63
  %v65 = vld [vmem:[%s1 + $0x9] sm:$0x1]
  %v66 = vperm.slane %v65, 0
  %v67 = vadd.f32 %v64, %v66
  %v68 = vtanh.pop %v67
  %v69 = vld [vmem:[%s1 + $0x2] sm:$0x1]
  %v70 = vperm.slane %v69, 0
  %v71 = vmul.f32 %v34, %v70
  %v72 = vld [vmem:[%s1 + $0x6] sm:$0x1]
  %v73 = vperm.slane %v72, 0
  %v74 = vmul.f32 %v46, %v73
  %v75 = vadd.f32 %v71, %v74
  %v76 = vld [vmem:[%s1 + $0xa] sm:$0x1]
  %v77 = vperm.slane %v76, 0
  %v78 = vadd.f32 %v75, %v77
  %v79 = vtanh.pop %v78
  %v80 = vld [vmem:[%s1 + $0x3] sm:$0x1]
  %v81 = vperm.slane %v80, 0
  %v82 = vmul.f32 %v34, %v81
  %v83 = vld [vmem:[%s1 + $0x7] sm:$0x1]
  %v84 = vperm.slane %v83, 0
  %v85 = vmul.f32 %v46, %v84
  %v86 = vadd.f32 %v82, %v85
  %v87 = vld [vmem:[%s1 + $0xb] sm:$0x1]
  %v88 = vperm.slane %v87, 0
  %v89 = vadd.f32 %v86, %v88
  %v90 = vtanh.pop %v89
  %v91 = vadd.f32 %v57, %v68
  %v92 = vadd.f32 %v91, %v79
  %v93 = vadd.f32 %v92, %v90
  %v94 = vmul.f32 %v93, 0.25
  %v95 = vsub.f32 %v57, %v94
  %v96 = vsub.f32 %v68, %v94
  %v97 = vsub.f32 %v79, %v94
  %v98 = vsub.f32 %v90, %v94
  %v99 = vmul.f32 %v95, %v95
  %v100 = vmul.f32 %v96, %v96
  %v101 = vadd.f32 %v99, %v100
  %v102 = vmul.f32 %v97, %v97
  %v103 = vadd.f32 %v101, %v102
  %v104 = vmul.f32 %v98, %v98
  %v105 = vadd.f32 %v103, %v104
  %v106 = vmul.f32 %v105, 0.25
  %v107 = vadd.f32 %v106, 1e-05
  %v108 = vrsqrt.pop %v107
  %v109 = vmul.f32 %v108, %v107
  %v110 = vmul.f32 %v109, %v108
  %v111 = vmul.f32 0.5, %v110
  %v112 = vsub.f32 1.5, %v111
  %v113 = vmul.f32 %v108, %v112
  %vm114 = vweird.f32 %v107
  %vm115 = vweird.f32 %v108
  %vm116 = vmor %vm114, %vm115
  %v117 = vsel %vm116, %v108, %v113
  %v118 = vmul.f32 %v95, %v117
  %v119 = vmul.f32 %v96, %v117
  %v120 = vmul.f32 %v97, %v117
  %v121 = vmul.f32 %v98, %v117
  %v122 = vld [vmem:[%s1 + $0x1c] sm:$0x1]
  %v123 = vld [vmem:[%s1 + $0xc] sm:$0x1]
  %v124 = vperm.slane %v123, 0
  %v125 = vmul.f32 %v118, %v124
  %v126 = vperm.slane %v122, 0
  %v127 = vadd.f32 %v126, %v125
  %v128 = vld [vmem:[%s1 + $0x10] sm:$0x1]
  %v129 = vperm.slane %v128, 0
  %v130 = vmul.f32 %v119, %v129
  %v131 = vadd.f32 %v127, %v130
  %v132 = vld [vmem:[%s1 + $0x14] sm:$0x1]
  %v133 = vperm.slane %v132, 0
  %v134 = vmul.f32 %v120, %v133
  %v135 = vadd.f32 %v131, %v134
  %v136 = vld [vmem:[%s1 + $0x18] sm:$0x1]
  %v137 = vperm.slane %v136, 0
  %v138 = vmul.f32 %v121, %v137
  %v139 = vadd.f32 %v135, %v138
  %v140 = vtanh.pop %v139
  %v141 = vld [vmem:[%s1 + $0x1d] sm:$0x1]
  %v142 = vld [vmem:[%s1 + $0xd] sm:$0x1]
  %v143 = vperm.slane %v142, 0
  %v144 = vmul.f32 %v118, %v143
  %v145 = vperm.slane %v141, 0
  %v146 = vadd.f32 %v145, %v144
  %v147 = vld [vmem:[%s1 + $0x11] sm:$0x1]
  %v148 = vperm.slane %v147, 0
  %v149 = vmul.f32 %v119, %v148
  %v150 = vadd.f32 %v146, %v149
  %v151 = vld [vmem:[%s1 + $0x15] sm:$0x1]
  %v152 = vperm.slane %v151, 0
  %v153 = vmul.f32 %v120, %v152
  %v154 = vadd.f32 %v150, %v153
  %v155 = vld [vmem:[%s1 + $0x19] sm:$0x1]
  %v156 = vperm.slane %v155, 0
  %v157 = vmul.f32 %v121, %v156
  %v158 = vadd.f32 %v154, %v157
  %v159 = vtanh.pop %v158
  %v160 = vld [vmem:[%s1 + $0x1e] sm:$0x1]
  %v161 = vld [vmem:[%s1 + $0xe] sm:$0x1]
  %v162 = vperm.slane %v161, 0
  %v163 = vmul.f32 %v118, %v162
  %v164 = vperm.slane %v160, 0
  %v165 = vadd.f32 %v164, %v163
  %v166 = vld [vmem:[%s1 + $0x12] sm:$0x1]
  %v167 = vperm.slane %v166, 0
  %v168 = vmul.f32 %v119, %v167
  %v169 = vadd.f32 %v165, %v168
  %v170 = vld [vmem:[%s1 + $0x16] sm:$0x1]
  %v171 = vperm.slane %v170, 0
  %v172 = vmul.f32 %v120, %v171
  %v173 = vadd.f32 %v169, %v172
  %v174 = vld [vmem:[%s1 + $0x1a] sm:$0x1]
  %v175 = vperm.slane %v174, 0
  %v176 = vmul.f32 %v121, %v175
  %v177 = vadd.f32 %v173, %v176
  %v178 = vtanh.pop %v177
  %v179 = vld [vmem:[%s1 + $0x1f] sm:$0x1]
  %v180 = vld [vmem:[%s1 + $0xf] sm:$0x1]
  %v181 = vperm.slane %v180, 0
  %v182 = vmul.f32 %v118, %v181
  %v183 = vperm.slane %v179, 0
  %v184 = vadd.f32 %v183, %v182
  %v185 = vld [vmem:[%s1 + $0x13] sm:$0x1]
  %v186 = vperm.slane %v185, 0
  %v187 = vmul.f32 %v119, %v186
  %v188 = vadd.f32 %v184, %v187
  %v189 = vld [vmem:[%s1 + $0x17] sm:$0x1]
  %v190 = vperm.slane %v189, 0
  %v191 = vmul.f32 %v120, %v190
  %v192 = vadd.f32 %v188, %v191
  %v193 = vld [vmem:[%s1 + $0x1b] sm:$0x1]
  %v194 = vperm.slane %v193, 0
  %v195 = vmul.f32 %v121, %v194
  %v196 = vadd.f32 %v192, %v195
  %v197 = vtanh.pop %v196
  %v198 = vadd.f32 %v140, %v159
  %v199 = vadd.f32 %v198, %v178
  %v200 = vadd.f32 %v199, %v197
  %v201 = vmul.f32 %v200, 0.25
  %v202 = vsub.f32 %v140, %v201
  %v203 = vsub.f32 %v159, %v201
  %v204 = vsub.f32 %v178, %v201
  %v205 = vsub.f32 %v197, %v201
  %v206 = vmul.f32 %v202, %v202
  %v207 = vmul.f32 %v203, %v203
  %v208 = vadd.f32 %v206, %v207
  %v209 = vmul.f32 %v204, %v204
  %v210 = vadd.f32 %v208, %v209
  %v211 = vmul.f32 %v205, %v205
  %v212 = vadd.f32 %v210, %v211
  %v213 = vmul.f32 %v212, 0.25
  %v214 = vadd.f32 %v213, 1e-05
  %v215 = vrsqrt.pop %v214
  %v216 = vmul.f32 %v215, %v214
  %v217 = vmul.f32 %v216, %v215
  %v218 = vmul.f32 0.5, %v217
  %v219 = vsub.f32 1.5, %v218
  %v220 = vmul.f32 %v215, %v219
  %vm221 = vweird.f32 %v214
  %vm222 = vweird.f32 %v215
  %vm223 = vmor %vm221, %vm222
  %v224 = vsel %vm223, %v215, %v220
  %v225 = vmul.f32 %v202, %v224
  %v226 = vmul.f32 %v203, %v224
  %v227 = vmul.f32 %v204, %v224
  %v228 = vmul.f32 %v205, %v224
  %v229 = vld [vmem:[%s1 + $0x28] sm:$0x1]
  %v230 = vld [vmem:[%s1 + $0x20] sm:$0x1]
  %v231 = vperm.slane %v230, 0
  %v232 = vmul.f32 %v225, %v231
  %v233 = vperm.slane %v229, 0
  %v234 = vadd.f32 %v233, %v232
  %v235 = vld [vmem:[%s1 + $0x22] sm:$0x1]
  %v236 = vperm.slane %v235, 0
  %v237 = vmul.f32 %v226, %v236
  %v238 = vadd.f32 %v234, %v237
  %v239 = vld [vmem:[%s1 + $0x24] sm:$0x1]
  %v240 = vperm.slane %v239, 0
  %v241 = vmul.f32 %v227, %v240
  %v242 = vadd.f32 %v238, %v241
  %v243 = vld [vmem:[%s1 + $0x26] sm:$0x1]
  %v244 = vperm.slane %v243, 0
  %v245 = vmul.f32 %v228, %v244
  %v246 = vadd.f32 %v242, %v245
  %v247 = vld [vmem:[%s1 + $0x29] sm:$0x1]
  %v248 = vld [vmem:[%s1 + $0x21] sm:$0x1]
  %v249 = vperm.slane %v248, 0
  %v250 = vmul.f32 %v225, %v249
  %v251 = vperm.slane %v247, 0
  %v252 = vadd.f32 %v251, %v250
  %v253 = vld [vmem:[%s1 + $0x23] sm:$0x1]
  %v254 = vperm.slane %v253, 0
  %v255 = vmul.f32 %v226, %v254
  %v256 = vadd.f32 %v252, %v255
  %v257 = vld [vmem:[%s1 + $0x25] sm:$0x1]
  %v258 = vperm.slane %v257, 0
  %v259 = vmul.f32 %v227, %v258
  %v260 = vadd.f32 %v256, %v259
  %v261 = vld [vmem:[%s1 + $0x27] sm:$0x1]
  %v262 = vperm.slane %v261, 0
  %v263 = vmul.f32 %v228, %v262
  %v264 = vadd.f32 %v260, %v263
  %v265 = vmax.f32 %v246, %v264
  %v266 = vsub.f32 %v246, %v265
  %v267 = vsub.f32 %v264, %v265
  %v268 = vmul.f32 %v266, 1.442695
  %v269 = vpow.pop %v268
  %v270 = vmul.f32 %v267, 1.442695
  %v271 = vpow.pop %v270
  %v272 = vadd.f32 %v269, %v271
  %v273 = vrcp.pop %v272
  %v274 = vmul.f32 %v272, %v273
  %v275 = vsub.f32 1.0, %v274
  %v276 = vmul.f32 %v273, %v275
  %v277 = vadd.f32 %v273, %v276
  %vm278 = vweird.f32 %v272
  %vm279 = vweird.f32 %v273
  %vm280 = vmor %vm278, %vm279
  %v281 = vsel %vm280, %v273, %v277
  %v282 = vand.u32 2147483647, %v272
  %vm283 = vcmp.eq.f32.partialorder %v282, 8.507059e+37
  %v284 = vand.u32 %v272, 2147483648
  %v285 = vor.u32 1.1754944e-38, %v284
  %v286 = vsel %vm283, %v285, %v281
  %v287 = vlog2.pop %v272
  %v288 = vmul.f32 %v287, 0.6931472
  %v289 = vmul.f32 %v269, %v286
  %v290 = vmul.f32 %v271, %v286
  %v291 = vsub.f32 %v266, %v288
  %v292 = vsub.f32 %v267, %v288
  %v293 = vld [vmem:[%s1 + $0x32] sm:$0x1]
  %v294 = vld [vmem:[%s1 + $0x2a] sm:$0x1]
  %v295 = vperm.slane %v294, 0
  %v296 = vmul.f32 %v225, %v295
  %v297 = vperm.slane %v293, 0
  %v298 = vadd.f32 %v297, %v296
  %v299 = vld [vmem:[%s1 + $0x2c] sm:$0x1]
  %v300 = vperm.slane %v299, 0
  %v301 = vmul.f32 %v226, %v300
  %v302 = vadd.f32 %v298, %v301
  %v303 = vld [vmem:[%s1 + $0x2e] sm:$0x1]
  %v304 = vperm.slane %v303, 0
  %v305 = vmul.f32 %v227, %v304
  %v306 = vadd.f32 %v302, %v305
  %v307 = vld [vmem:[%s1 + $0x30] sm:$0x1]
  %v308 = vperm.slane %v307, 0
  %v309 = vmul.f32 %v228, %v308
  %v310 = vadd.f32 %v306, %v309
  %v311 = vxor.u32 %v310, 2147483648
  %v312 = vmul.f32 %v311, 1.442695
  %v313 = vpow.pop %v312
  %v314 = vadd.f32 %v313, 1.0
  %v315 = vrcp.pop %v314
  %v316 = vmul.f32 %v314, %v315
  %v317 = vsub.f32 1.0, %v316
  %v318 = vmul.f32 %v315, %v317
  %v319 = vadd.f32 %v315, %v318
  %vm320 = vweird.f32 %v314
  %vm321 = vweird.f32 %v315
  %vm322 = vmor %vm320, %vm321
  %v323 = vsel %vm322, %v315, %v319
  %v324 = vand.u32 2147483647, %v314
  %vm325 = vcmp.eq.f32.partialorder %v324, 8.507059e+37
  %v326 = vand.u32 %v314, 2147483648
  %v327 = vor.u32 1.1754944e-38, %v326
  %v328 = vsel %vm325, %v327, %v323
  %v329 = vmul.f32 1.0, %v328
  %v330 = vld [vmem:[%s1 + $0x33] sm:$0x1]
  %v331 = vld [vmem:[%s1 + $0x2b] sm:$0x1]
  %v332 = vperm.slane %v331, 0
  %v333 = vmul.f32 %v225, %v332
  %v334 = vperm.slane %v330, 0
  %v335 = vadd.f32 %v334, %v333
  %v336 = vld [vmem:[%s1 + $0x2d] sm:$0x1]
  %v337 = vperm.slane %v336, 0
  %v338 = vmul.f32 %v226, %v337
  %v339 = vadd.f32 %v335, %v338
  %v340 = vld [vmem:[%s1 + $0x2f] sm:$0x1]
  %v341 = vperm.slane %v340, 0
  %v342 = vmul.f32 %v227, %v341
  %v343 = vadd.f32 %v339, %v342
  %v344 = vld [vmem:[%s1 + $0x31] sm:$0x1]
  %v345 = vperm.slane %v344, 0
  %v346 = vmul.f32 %v228, %v345
  %v347 = vadd.f32 %v343, %v346
  %v348 = vxor.u32 %v347, 2147483648
  %v349 = vmul.f32 %v348, 1.442695
  %v350 = vpow.pop %v349
  %v351 = vadd.f32 %v350, 1.0
  %v352 = vrcp.pop %v351
  %v353 = vmul.f32 %v351, %v352
  %v354 = vsub.f32 1.0, %v353
  %v355 = vmul.f32 %v352, %v354
  %v356 = vadd.f32 %v352, %v355
  %vm357 = vweird.f32 %v351
  %vm358 = vweird.f32 %v352
  %vm359 = vmor %vm357, %vm358
  %v360 = vsel %vm359, %v352, %v356
  %v361 = vand.u32 2147483647, %v351
  %vm362 = vcmp.eq.f32.partialorder %v361, 8.507059e+37
  %v363 = vand.u32 %v351, 2147483648
  %v364 = vor.u32 1.1754944e-38, %v363
  %v365 = vsel %vm362, %v364, %v360
  %v366 = vmul.f32 1.0, %v365
  %368 = vrot.lane.b32.xlu0 %v290, 16
  %v369 = vpop.permute.xlu0 %368
  %372 = vrot.lane.b32.xlu0 %v291, 32
  %v373 = vpop.permute.xlu0 %372
  %376 = vrot.lane.b32.xlu0 %v292, 48
  %v377 = vpop.permute.xlu0 %376
  %380 = vrot.lane.b32.xlu0 %v329, 64
  %v381 = vpop.permute.xlu0 %380
  %384 = vrot.lane.b32.xlu0 %v366, 80
  %v385 = vpop.permute.xlu0 %384
  %vm387 = vcmask 130048
  %v388 = vsel %vm387, %v289, %v369
  %vm389 = vcmask 261120
  %v390 = vsel %vm389, %v388, %v373
  %vm391 = vcmask 392192
  %v392 = vsel %vm391, %v390, %v377
  %vm393 = vcmask 523264
  %v394 = vsel %vm393, %v392, %v381
  %vm395 = vcmask 654336
  %v396 = vsel %vm395, %v394, %v385
  %vm397 = vcmask 785408
  %v398 = vsel %vm397, %v396, 0.0
  %399 = vst [vmem:[%s2] sm:$0xff] %v398
  // Predicated region
  $region10: #{pairwise_option_network.1} parent=0 // pred_check
    _
  $region11: #{pairwise_option_network.1} parent=0 // pred_check_branch
    %401 = sbr.rel (0) target = $region13
  $region12: #{pairwise_option_network.1} parent=0 // pred_region
    _
  $region13: #{pairwise_option_network.1} parent=0 // pred_fallthru
    _
  // Predicated region
  $region14: #{pairwise_option_network.1} parent=0 // pred_check
    _
  $region15: #{pairwise_option_network.1} parent=0 // pred_check_branch
    %403 = sbr.rel (0) target = $region17
  $region16: #{pairwise_option_network.1} parent=0 // pred_region
    _
  $region17: #{pairwise_option_network.1} parent=0 // pred_fallthru
    _

</llo_original>
